<compile_context>
chip_gen: v6e
topology: v6e:2x2x1
jax: 0.10.0
libtpu: 0.0.40
codegen_flags: <defaults>
</compile_context>

<pallas_src>
import numpy as np
import jax
import jax.numpy as jnp
from jax import lax
from jax.experimental import pallas as pl
from jax.experimental.pallas import tpu as pltpu


def _elu(v):
    # ELU(alpha=1): v if v > 0 else exp(v) - 1  (clamp exp arg in the dead branch)
    return jnp.where(v > 0, v, jnp.exp(jnp.minimum(v, 0.0)) - 1.0)


# ----------------------------------------------------------------------------- kernel
def resblock_kernel(x_ref, w1_ref, b1_ref, a_ref, b2_ref, g_ref, bt_ref,
                    o_ref, pad_ref):
    # x_ref: (1, H, L) with L = 2*W*C (two samples packed along lanes)
    _, H, L = x_ref.shape
    wc = L // 2                                  # per-sample lane span (= W*C)

    x = x_ref[0]                                 # (H, L), lane-dense load

    # ---- BasicConv #1: 1x1 conv + ELU, one K=L matmul vs. block-diagonal weight
    h1 = jnp.dot(x, w1_ref[...], preferred_element_type=jnp.float32) + b1_ref[...]
    h1 = _elu(h1)

    # ---- BasicConv #2: 3x3 conv (zero pad 1) + ELU.
    # Zero only the two vertical halo rows; the interior is fully overwritten.
    zrow = jnp.zeros((1, L), jnp.float32)
    pad_ref[0:1, :] = zrow
    pad_ref[H + 1:H + 2, :] = zrow
    pad_ref[1:H + 1, :] = h1                     # full-width (unmasked) store

    # One banded matmul per kernel row dy; dx shifts + horizontal zero padding
    # are baked into a_ref[dy] (built in the wrapper), so only dy is a sublane shift.
    acc = jnp.dot(pad_ref[0:H, :], a_ref[0], preferred_element_type=jnp.float32)
    acc = acc + jnp.dot(pad_ref[1:H + 1, :], a_ref[1],
                        preferred_element_type=jnp.float32)
    acc = acc + jnp.dot(pad_ref[2:H + 2, :], a_ref[2],
                        preferred_element_type=jnp.float32)
    h2 = _elu(acc + b2_ref[...])

    # ---- residual add
    y = h2 + x                                   # (H, L)

    # ---- GroupNorm(num_groups=1, C), eps=1e-5, biased variance, per packed sample
    # One-pass stats: var = E[y^2] - mean^2, split per sample with a lane mask.
    lane = lax.broadcasted_iota(jnp.int32, (1, L), 1)
    m_lo = (lane < wc).astype(jnp.float32)       # 1.0 on sample-0 lanes
    n = float(H * wc)                            # elements per sample (= H*W*C)
    ysq = y * y
    s_all = jnp.sum(y)
    s0 = jnp.sum(y * m_lo)
    s1 = s_all - s0
    q_all = jnp.sum(ysq)
    q0 = jnp.sum(ysq * m_lo)
    q1 = q_all - q0
    m0 = s0 / n
    m1 = s1 / n
    v0 = q0 / n - m0 * m0
    v1 = q1 / n - m1 * m1
    inv0 = lax.rsqrt(v0 + 1e-5)
    inv1 = lax.rsqrt(v1 + 1e-5)
    mean_v = jnp.where(lane < wc, m0, m1)        # (1, L), per-sample broadcast
    inv_v = jnp.where(lane < wc, inv0, inv1)
    ynorm = (y - mean_v) * inv_v * g_ref[...] + bt_ref[...]

    # ---- final ELU, lane-dense unmasked writeback
    o_ref[0] = _elu(ynorm).astype(o_ref.dtype)


# ----------------------------------------------------------------------------- pallas wrapper
def _resblock_pallas(xp, w1b, b1l, band, b2l, gl, bl):
    N2, H, L = xp.shape
    return pl.pallas_call(
        resblock_kernel,
        out_shape=jax.ShapeDtypeStruct((N2, H, L), xp.dtype),
        grid_spec=pltpu.PrefetchScalarGridSpec(
            num_scalar_prefetch=0,
            grid=(N2,),
            in_specs=[
                pl.BlockSpec((1, H, L), lambda p: (p, 0, 0)),   # packed activations
                pl.BlockSpec((L, L), lambda p: (0, 0)),         # block-diag 1x1 weight
                pl.BlockSpec((1, L), lambda p: (0, 0)),         # bias1 (lane-tiled)
                pl.BlockSpec((3, L, L), lambda p: (0, 0, 0)),   # banded 3x3 weights
                pl.BlockSpec((1, L), lambda p: (0, 0)),         # bias2
                pl.BlockSpec((1, L), lambda p: (0, 0)),         # GroupNorm gamma
                pl.BlockSpec((1, L), lambda p: (0, 0)),         # GroupNorm beta
            ],
            out_specs=pl.BlockSpec((1, H, L), lambda p: (p, 0, 0)),
            scratch_shapes=[pltpu.VMEM((H + 2, L), jnp.float32)],   # vertical-halo pad
        ),
        compiler_params=pltpu.CompilerParams(
            dimension_semantics=("parallel",)),
    )(xp, w1b, b1l, band, b2l, gl, bl)


# ----------------------------------------------------------------------------- param / layout prep
def _shift_matrix(W, offset):
    """S[src, dst] = 1 if src == dst + offset; missing rows encode zero padding."""
    s = np.zeros((W, W), np.float32)
    for d in range(W):
        src = d + offset
        if 0 <= src < W:
            s[src, d] = 1.0
    return s


def _expand_resblock_params(w1_t, b1, w2_t, b2, gamma, beta, W, n_pack=2):
    """Expand torch-layout ResBlock params to the packed lane-dense kernel form."""
    C = w1_t.shape[0]
    L = n_pack * W * C
    n_rep = L // C

    # 1x1 conv: (Cout, Cin, 1, 1) -> (Cin, Cout) -> block-diagonal (L, L)
    w1_io = jnp.transpose(w1_t[:, :, 0, 0], (1, 0)).astype(jnp.float32)
    w1_block = jnp.kron(jnp.eye(n_rep, dtype=jnp.float32), w1_io)

    # 3x3 conv: (Cout, Cin, kh, kw) -> (kh, kw, Cin, Cout) -> banded (3, L, L)
    # band[dy][(s, w+dx-1, ci), (s, w, co)] = w2[dy, dx, ci, co]   (zero pad at edges)
    w2_k = jnp.transpose(w2_t, (2, 3, 1, 0)).astype(jnp.float32)
    eye_p = np.eye(n_pack, dtype=np.float32)
    bands = []
    for dy in range(3):
        a = jnp.zeros((L, L), jnp.float32)
        for dx in range(3):
            sel = np.kron(eye_p, _shift_matrix(W, dx - 1))      # block-diag over samples
            a = a + jnp.kron(jnp.asarray(sel), w2_k[dy, dx])
        bands.append(a)
    band = jnp.stack(bands)                                     # (3, L, L)

    def tile_l(v):
        return jnp.tile(v.astype(jnp.float32), n_rep).reshape(1, L)

    return w1_block, tile_l(b1), band, tile_l(b2), tile_l(gamma), tile_l(beta)


def _pack_pairs(x_nchw):
    """NCHW -> (N/2, H, 2*W*C): two samples side-by-side along the lane axis."""
    N, C, H, W = x_nchw.shape
    x = jnp.transpose(x_nchw, (0, 2, 3, 1)).reshape(N, H, W * C)   # NHWC, lane = (w, c)
    x = x.reshape(N // 2, 2, H, W * C)
    return jnp.transpose(x, (0, 2, 1, 3)).reshape(N // 2, H, 2 * W * C)


def _unpack_pairs(xp, N, C, H, W):
    x = xp.reshape(N // 2, H, 2, W * C)
    x = jnp.transpose(x, (0, 2, 1, 3)).reshape(N, H, W, C)
    return jnp.transpose(x, (0, 3, 1, 2))                          # back to NCHW


def eblock_forward(x_nchw, layer_params):
    """EBlock forward. x_nchw: (N, C, H, W). layer_params: list of torch-layout
    tuples (w1 (C,C,1,1), b1 (C,), w2 (C,C,3,3), b2 (C,), gamma (C,), beta (C,))."""
    N, C, H, W = x_nchw.shape
    n_pad = (-N) % 2
    if n_pad:                                    # pad batch to even, drop at the end
        x_nchw = jnp.concatenate(
            [x_nchw, jnp.zeros((n_pad, C, H, W), x_nchw.dtype)], axis=0)
    xp = _pack_pairs(x_nchw)
    for (w1, b1, w2, b2, g, bt) in layer_params:
        xp = _resblock_pallas(
            xp, *_expand_resblock_params(w1, b1, w2, b2, g, bt, W))
    return _unpack_pairs(xp, N + n_pad, C, H, W)[:N]


# ----------------------------------------------------------------------------- pure-JAX reference
def eblock_reference(x_nchw, layer_params):
    x = x_nchw
    for (w1, b1, w2, b2, g, bt) in layer_params:
        h1 = jnp.einsum('nchw,oc->nohw', x, w1[:, :, 0, 0]) + b1[None, :, None, None]
        h1 = _elu(h1)
        h2 = lax.conv_general_dilated(
            h1, w2, window_strides=(1, 1), padding=((1, 1), (1, 1)),
            dimension_numbers=('NCHW', 'OIHW', 'NCHW'))
        h2 = _elu(h2 + b2[None, :, None, None])
        y = h2 + x
        mean = jnp.mean(y, axis=(1, 2, 3), keepdims=True)
        var = jnp.mean((y - mean) ** 2, axis=(1, 2, 3), keepdims=True)
        yn = (y - mean) * lax.rsqrt(var + 1e-5)
        yn = yn * g[None, :, None, None] + bt[None, :, None, None]
        x = _elu(yn)
    return x


if __name__ == "__main__":
    # EBlock(out_channel=C, num_res=1) — residual add requires in == out channels.
    N, C, H, W = 2, 4, 16, 16
    num_res = 1

    key = jax.random.PRNGKey(0)
    kx, *pkeys = jax.random.split(key, 1 + 6 * num_res)

    x = jax.random.normal(kx, (N, C, H, W), jnp.float32)            # PyTorch NCHW input

    layer_params = []
    for r in range(num_res):
        k1, kb1, k2, kb2, kg, kb = pkeys[6 * r: 6 * r + 6]
        w1 = jax.random.normal(k1, (C, C, 1, 1), jnp.float32) * 0.3  # conv1 (Cout,Cin,1,1)
        b1 = jax.random.normal(kb1, (C,), jnp.float32) * 0.1
        w2 = jax.random.normal(k2, (C, C, 3, 3), jnp.float32) * 0.1  # conv2 (Cout,Cin,3,3)
        b2 = jax.random.normal(kb2, (C,), jnp.float32) * 0.1
        g = 1.0 + jax.random.normal(kg, (C,), jnp.float32) * 0.05    # GroupNorm weight
        bt = jax.random.normal(kb, (C,), jnp.float32) * 0.05         # GroupNorm bias
        layer_params.append((w1, b1, w2, b2, g, bt))

    out = jax.block_until_ready(jax.jit(eblock_forward)(x, layer_params))
    ref = jax.block_until_ready(eblock_reference(x, layer_params))

    assert out.shape == (N, C, H, W) and out.dtype == jnp.float32
    err = float(jnp.max(jnp.abs(out - ref)))
    assert err < 1e-3, f"max abs error vs reference: {err}"
    print("KERNEL_OK")
</pallas_src>

<mosaic_0001>
module attributes {stable_mosaic.version = 11 : i64} {
  func.func @resblock_kernel(%arg0: i32, %arg1: memref<1x16x128xf32, #tpu.memory_space<vmem>>, %arg2: memref<128x128xf32, #tpu.memory_space<vmem>>, %arg3: memref<1x128xf32, #tpu.memory_space<vmem>>, %arg4: memref<3x128x128xf32, #tpu.memory_space<vmem>>, %arg5: memref<1x128xf32, #tpu.memory_space<vmem>>, %arg6: memref<1x128xf32, #tpu.memory_space<vmem>>, %arg7: memref<1x128xf32, #tpu.memory_space<vmem>>, %arg8: memref<1x16x128xf32, #tpu.memory_space<vmem>>, %arg9: memref<18x128xf32, #tpu.memory_space<vmem>>) attributes {dimension_semantics = [#tpu.dimension_semantics<parallel>], iteration_bounds = array<i64: 1>, scalar_prefetch = 0 : i64, scratch_operands = 1 : i64, tpu.core_type = #tpu.core_type<tc>, window_params = [{transform_indices = @transform_0, window_bounds = array<i64: 1, 16, 128>}, {pipeline_mode = #tpu.pipeline_mode<synchronous>, transform_indices = @transform_1, window_bounds = array<i64: 128, 128>}, {pipeline_mode = #tpu.pipeline_mode<synchronous>, transform_indices = @transform_2, window_bounds = array<i64: 1, 128>}, {pipeline_mode = #tpu.pipeline_mode<synchronous>, transform_indices = @transform_3, window_bounds = array<i64: 3, 128, 128>}, {pipeline_mode = #tpu.pipeline_mode<synchronous>, transform_indices = @transform_4, window_bounds = array<i64: 1, 128>}, {pipeline_mode = #tpu.pipeline_mode<synchronous>, transform_indices = @transform_5, window_bounds = array<i64: 1, 128>}, {pipeline_mode = #tpu.pipeline_mode<synchronous>, transform_indices = @transform_6, window_bounds = array<i64: 1, 128>}, {transform_indices = @transform_7, window_bounds = array<i64: 1, 16, 128>}]} {
    %c0 = arith.constant 0 : index
    %c0_0 = arith.constant 0 : index
    %c0_1 = arith.constant 0 : index
    %0 = vector.load %arg1[%c0, %c0_0, %c0_1] : memref<1x16x128xf32, #tpu.memory_space<vmem>>, vector<1x16x128xf32>
    %1 = vector.shape_cast %0 : vector<1x16x128xf32> to vector<16x128xf32>
    %c0_2 = arith.constant 0 : index
    %c0_3 = arith.constant 0 : index
    %2 = vector.load %arg2[%c0_2, %c0_3] : memref<128x128xf32, #tpu.memory_space<vmem>>, vector<128x128xf32>
    %cst = arith.constant dense<0.000000e+00> : vector<16x128xf32>
    %3 = tpu.matmul %1, %2, %cst {dimension_numbers = #tpu.dot_dimension_numbers<[1], [0], [0], [1], [0, 0, 1, 1], [], []>} : vector<16x128xf32>, vector<128x128xf32>, vector<16x128xf32> -> vector<16x128xf32>
    %c0_4 = arith.constant 0 : index
    %c0_5 = arith.constant 0 : index
    %4 = vector.load %arg3[%c0_4, %c0_5] : memref<1x128xf32, #tpu.memory_space<vmem>>, vector<1x128xf32>
    %5 = vector.broadcast %4 : vector<1x128xf32> to vector<16x128xf32>
    %6 = arith.addf %3, %5 : vector<16x128xf32>
    %cst_6 = arith.constant 0.000000e+00 : f32
    %7 = vector.broadcast %cst_6 : f32 to vector<16x128xf32>
    %8 = arith.cmpf ogt, %6, %7 : vector<16x128xf32>
    %cst_7 = arith.constant 0.000000e+00 : f32
    %9 = vector.broadcast %cst_7 : f32 to vector<16x128xf32>
    %10 = arith.minimumf %6, %9 : vector<16x128xf32>
    %11 = math.exp %10 : vector<16x128xf32>
    %cst_8 = arith.constant 1.000000e+00 : f32
    %12 = vector.broadcast %cst_8 : f32 to vector<16x128xf32>
    %13 = arith.subf %11, %12 : vector<16x128xf32>
    %14 = arith.select %8, %6, %13 : vector<16x128xi1>, vector<16x128xf32>
    %cst_9 = arith.constant 0.000000e+00 : f32
    %15 = vector.broadcast %cst_9 : f32 to vector<1x128xf32>
    %c0_10 = arith.constant 0 : index
    %c0_11 = arith.constant 0 : index
    %16 = vector.load %arg9[%c0_10, %c0_11] : memref<18x128xf32, #tpu.memory_space<vmem>>, vector<1x128xf32>
    tpu.vector_store %arg9[%c0_10, %c0_11], %15 {strides = array<i32>} : memref<18x128xf32, #tpu.memory_space<vmem>>, vector<1x128xf32>,
    %c17 = arith.constant 17 : index
    %c0_12 = arith.constant 0 : index
    %17 = vector.load %arg9[%c17, %c0_12] : memref<18x128xf32, #tpu.memory_space<vmem>>, vector<1x128xf32>
    tpu.vector_store %arg9[%c17, %c0_12], %15 {strides = array<i32>} : memref<18x128xf32, #tpu.memory_space<vmem>>, vector<1x128xf32>,
    %c1 = arith.constant 1 : index
    %c0_13 = arith.constant 0 : index
    %18 = vector.load %arg9[%c1, %c0_13] : memref<18x128xf32, #tpu.memory_space<vmem>>, vector<16x128xf32>
    tpu.vector_store %arg9[%c1, %c0_13], %14 {strides = array<i32>} : memref<18x128xf32, #tpu.memory_space<vmem>>, vector<16x128xf32>,
    %c0_14 = arith.constant 0 : index
    %c0_15 = arith.constant 0 : index
    %19 = vector.load %arg9[%c0_14, %c0_15] : memref<18x128xf32, #tpu.memory_space<vmem>>, vector<16x128xf32>
    %c0_16 = arith.constant 0 : index
    %c0_17 = arith.constant 0 : index
    %c0_18 = arith.constant 0 : index
    %20 = vector.load %arg4[%c0_16, %c0_17, %c0_18] : memref<3x128x128xf32, #tpu.memory_space<vmem>>, vector<1x128x128xf32>
    %21 = vector.shape_cast %20 : vector<1x128x128xf32> to vector<128x128xf32>
    %cst_19 = arith.constant dense<0.000000e+00> : vector<16x128xf32>
    %22 = tpu.matmul %19, %21, %cst_19 {dimension_numbers = #tpu.dot_dimension_numbers<[1], [0], [0], [1], [0, 0, 1, 1], [], []>} : vector<16x128xf32>, vector<128x128xf32>, vector<16x128xf32> -> vector<16x128xf32>
    %c1_20 = arith.constant 1 : index
    %c0_21 = arith.constant 0 : index
    %23 = vector.load %arg9[%c1_20, %c0_21] : memref<18x128xf32, #tpu.memory_space<vmem>>, vector<16x128xf32>
    %c1_22 = arith.constant 1 : index
    %c0_23 = arith.constant 0 : index
    %c0_24 = arith.constant 0 : index
    %24 = vector.load %arg4[%c1_22, %c0_23, %c0_24] : memref<3x128x128xf32, #tpu.memory_space<vmem>>, vector<1x128x128xf32>
    %25 = vector.shape_cast %24 : vector<1x128x128xf32> to vector<128x128xf32>
    %cst_25 = arith.constant dense<0.000000e+00> : vector<16x128xf32>
    %26 = tpu.matmul %23, %25, %cst_25 {dimension_numbers = #tpu.dot_dimension_numbers<[1], [0], [0], [1], [0, 0, 1, 1], [], []>} : vector<16x128xf32>, vector<128x128xf32>, vector<16x128xf32> -> vector<16x128xf32>
    %27 = arith.addf %22, %26 : vector<16x128xf32>
    %c2 = arith.constant 2 : index
    %c0_26 = arith.constant 0 : index
    %28 = vector.load %arg9[%c2, %c0_26] : memref<18x128xf32, #tpu.memory_space<vmem>>, vector<16x128xf32>
    %c2_27 = arith.constant 2 : index
    %c0_28 = arith.constant 0 : index
    %c0_29 = arith.constant 0 : index
    %29 = vector.load %arg4[%c2_27, %c0_28, %c0_29] : memref<3x128x128xf32, #tpu.memory_space<vmem>>, vector<1x128x128xf32>
    %30 = vector.shape_cast %29 : vector<1x128x128xf32> to vector<128x128xf32>
    %cst_30 = arith.constant dense<0.000000e+00> : vector<16x128xf32>
    %31 = tpu.matmul %28, %30, %cst_30 {dimension_numbers = #tpu.dot_dimension_numbers<[1], [0], [0], [1], [0, 0, 1, 1], [], []>} : vector<16x128xf32>, vector<128x128xf32>, vector<16x128xf32> -> vector<16x128xf32>
    %32 = arith.addf %27, %31 : vector<16x128xf32>
    %c0_31 = arith.constant 0 : index
    %c0_32 = arith.constant 0 : index
    %33 = vector.load %arg5[%c0_31, %c0_32] : memref<1x128xf32, #tpu.memory_space<vmem>>, vector<1x128xf32>
    %34 = vector.broadcast %33 : vector<1x128xf32> to vector<16x128xf32>
    %35 = arith.addf %32, %34 : vector<16x128xf32>
    %cst_33 = arith.constant 0.000000e+00 : f32
    %36 = vector.broadcast %cst_33 : f32 to vector<16x128xf32>
    %37 = arith.cmpf ogt, %35, %36 : vector<16x128xf32>
    %cst_34 = arith.constant 0.000000e+00 : f32
    %38 = vector.broadcast %cst_34 : f32 to vector<16x128xf32>
    %39 = arith.minimumf %35, %38 : vector<16x128xf32>
    %40 = math.exp %39 : vector<16x128xf32>
    %cst_35 = arith.constant 1.000000e+00 : f32
    %41 = vector.broadcast %cst_35 : f32 to vector<16x128xf32>
    %42 = arith.subf %40, %41 : vector<16x128xf32>
    %43 = arith.select %37, %35, %42 : vector<16x128xi1>, vector<16x128xf32>
    %44 = arith.addf %43, %1 : vector<16x128xf32>
    %45 = tpu.iota {dimensions = array<i32: 1>} : vector<1x128xi32>
    %c64_i32 = arith.constant 64 : i32
    %46 = vector.broadcast %c64_i32 : i32 to vector<1x128xi32>
    %47 = arith.cmpi slt, %45, %46 : vector<1x128xi32>
    %48 = arith.extui %47 : vector<1x128xi1> to vector<1x128xi32>
    %49 = arith.sitofp %48 : vector<1x128xi32> to vector<1x128xf32>
    %50 = arith.mulf %44, %44 : vector<16x128xf32>
    %51 = vector.shape_cast %44 : vector<16x128xf32> to vector<1x16x128xf32>
    %cst_36 = arith.constant dense<0.000000e+00> : vector<1xf32>
    %52 = vector.multi_reduction <add>, %51, %cst_36 [1, 2] : vector<1x16x128xf32> to vector<1xf32>
    %53 = vector.shape_cast %52 : vector<1xf32> to vector<1x1x1xf32>
    %54 = vector.extract %53[0, 0, 0] : f32 from vector<1x1x1xf32>
    %55 = vector.broadcast %49 : vector<1x128xf32> to vector<16x128xf32>
    %56 = arith.mulf %44, %55 : vector<16x128xf32>
    %57 = vector.shape_cast %56 : vector<16x128xf32> to vector<1x16x128xf32>
    %cst_37 = arith.constant dense<0.000000e+00> : vector<1xf32>
    %58 = vector.multi_reduction <add>, %57, %cst_37 [1, 2] : vector<1x16x128xf32> to vector<1xf32>
    %59 = vector.shape_cast %58 : vector<1xf32> to vector<1x1x1xf32>
    %60 = vector.extract %59[0, 0, 0] : f32 from vector<1x1x1xf32>
    %61 = arith.subf %54, %60 : f32
    %62 = vector.shape_cast %50 : vector<16x128xf32> to vector<1x16x128xf32>
    %cst_38 = arith.constant dense<0.000000e+00> : vector<1xf32>
    %63 = vector.multi_reduction <add>, %62, %cst_38 [1, 2] : vector<1x16x128xf32> to vector<1xf32>
    %64 = vector.shape_cast %63 : vector<1xf32> to vector<1x1x1xf32>
    %65 = vector.extract %64[0, 0, 0] : f32 from vector<1x1x1xf32>
    %66 = vector.broadcast %49 : vector<1x128xf32> to vector<16x128xf32>
    %67 = arith.mulf %50, %66 : vector<16x128xf32>
    %68 = vector.shape_cast %67 : vector<16x128xf32> to vector<1x16x128xf32>
    %cst_39 = arith.constant dense<0.000000e+00> : vector<1xf32>
    %69 = vector.multi_reduction <add>, %68, %cst_39 [1, 2] : vector<1x16x128xf32> to vector<1xf32>
    %70 = vector.shape_cast %69 : vector<1xf32> to vector<1x1x1xf32>
    %71 = vector.extract %70[0, 0, 0] : f32 from vector<1x1x1xf32>
    %72 = arith.subf %65, %71 : f32
    %cst_40 = arith.constant 1.024000e+03 : f32
    %73 = arith.divf %60, %cst_40 : f32
    %cst_41 = arith.constant 1.024000e+03 : f32
    %74 = arith.divf %61, %cst_41 : f32
    %cst_42 = arith.constant 1.024000e+03 : f32
    %75 = arith.divf %71, %cst_42 : f32
    %76 = arith.mulf %73, %73 : f32
    %77 = arith.subf %75, %76 : f32
    %cst_43 = arith.constant 1.024000e+03 : f32
    %78 = arith.divf %72, %cst_43 : f32
    %79 = arith.mulf %74, %74 : f32
    %80 = arith.subf %78, %79 : f32
    %cst_44 = arith.constant 9.99999974E-6 : f32
    %81 = arith.addf %77, %cst_44 : f32
    %82 = math.rsqrt %81 : f32
    %cst_45 = arith.constant 9.99999974E-6 : f32
    %83 = arith.addf %80, %cst_45 : f32
    %84 = math.rsqrt %83 : f32
    %c64_i32_46 = arith.constant 64 : i32
    %85 = vector.broadcast %c64_i32_46 : i32 to vector<1x128xi32>
    %86 = arith.cmpi slt, %45, %85 : vector<1x128xi32>
    %87 = vector.broadcast %73 : f32 to vector<1x128xf32>
    %88 = vector.broadcast %74 : f32 to vector<1x128xf32>
    %89 = arith.select %86, %87, %88 : vector<1x128xi1>, vector<1x128xf32>
    %c64_i32_47 = arith.constant 64 : i32
    %90 = vector.broadcast %c64_i32_47 : i32 to vector<1x128xi32>
    %91 = arith.cmpi slt, %45, %90 : vector<1x128xi32>
    %92 = vector.broadcast %82 : f32 to vector<1x128xf32>
    %93 = vector.broadcast %84 : f32 to vector<1x128xf32>
    %94 = arith.select %91, %92, %93 : vector<1x128xi1>, vector<1x128xf32>
    %95 = vector.broadcast %89 : vector<1x128xf32> to vector<16x128xf32>
    %96 = arith.subf %44, %95 : vector<16x128xf32>
    %97 = vector.broadcast %94 : vector<1x128xf32> to vector<16x128xf32>
    %98 = arith.mulf %96, %97 : vector<16x128xf32>
    %c0_48 = arith.constant 0 : index
    %c0_49 = arith.constant 0 : index
    %99 = vector.load %arg6[%c0_48, %c0_49] : memref<1x128xf32, #tpu.memory_space<vmem>>, vector<1x128xf32>
    %100 = vector.broadcast %99 : vector<1x128xf32> to vector<16x128xf32>
    %101 = arith.mulf %98, %100 : vector<16x128xf32>
    %c0_50 = arith.constant 0 : index
    %c0_51 = arith.constant 0 : index
    %102 = vector.load %arg7[%c0_50, %c0_51] : memref<1x128xf32, #tpu.memory_space<vmem>>, vector<1x128xf32>
    %103 = vector.broadcast %102 : vector<1x128xf32> to vector<16x128xf32>
    %104 = arith.addf %101, %103 : vector<16x128xf32>
    %cst_52 = arith.constant 0.000000e+00 : f32
    %105 = vector.broadcast %cst_52 : f32 to vector<16x128xf32>
    %106 = arith.cmpf ogt, %104, %105 : vector<16x128xf32>
    %cst_53 = arith.constant 0.000000e+00 : f32
    %107 = vector.broadcast %cst_53 : f32 to vector<16x128xf32>
    %108 = arith.minimumf %104, %107 : vector<16x128xf32>
    %109 = math.exp %108 : vector<16x128xf32>
    %cst_54 = arith.constant 1.000000e+00 : f32
    %110 = vector.broadcast %cst_54 : f32 to vector<16x128xf32>
    %111 = arith.subf %109, %110 : vector<16x128xf32>
    %112 = arith.select %106, %104, %111 : vector<16x128xi1>, vector<16x128xf32>
    %c0_55 = arith.constant 0 : index
    %c0_56 = arith.constant 0 : index
    %c0_57 = arith.constant 0 : index
    %113 = vector.load %arg8[%c0_55, %c0_56, %c0_57] : memref<1x16x128xf32, #tpu.memory_space<vmem>>, vector<1x16x128xf32>
    %114 = vector.shape_cast %113 : vector<1x16x128xf32> to vector<16x128xf32>
    %115 = vector.shape_cast %112 : vector<16x128xf32> to vector<1x16x128xf32>
    tpu.vector_store %arg8[%c0_55, %c0_56, %c0_57], %115 {strides = array<i32>} : memref<1x16x128xf32, #tpu.memory_space<vmem>>, vector<1x16x128xf32>,
    return
  }
  func.func @transform_0(%arg0: i32) -> (i32, i32, i32) {
    %c0_i32 = arith.constant 0 : i32
    %c0_i32_0 = arith.constant 0 : i32
    %c0_i32_1 = arith.constant 0 : i32
    return %arg0, %c0_i32, %c0_i32_0 : i32, i32, i32
  }
  func.func @transform_1(%arg0: i32) -> (i32, i32) {
    %c0_i32 = arith.constant 0 : i32
    %c0_i32_0 = arith.constant 0 : i32
    %c0_i32_1 = arith.constant 0 : i32
    return %c0_i32, %c0_i32_0 : i32, i32
  }
  func.func @transform_2(%arg0: i32) -> (i32, i32) {
    %c0_i32 = arith.constant 0 : i32
    %c0_i32_0 = arith.constant 0 : i32
    %c0_i32_1 = arith.constant 0 : i32
    return %c0_i32, %c0_i32_0 : i32, i32
  }
  func.func @transform_3(%arg0: i32) -> (i32, i32, i32) {
    %c0_i32 = arith.constant 0 : i32
    %c0_i32_0 = arith.constant 0 : i32
    %c0_i32_1 = arith.constant 0 : i32
    %c0_i32_2 = arith.constant 0 : i32
    return %c0_i32, %c0_i32_0, %c0_i32_1 : i32, i32, i32
  }
  func.func @transform_4(%arg0: i32) -> (i32, i32) {
    %c0_i32 = arith.constant 0 : i32
    %c0_i32_0 = arith.constant 0 : i32
    %c0_i32_1 = arith.constant 0 : i32
    return %c0_i32, %c0_i32_0 : i32, i32
  }
  func.func @transform_5(%arg0: i32) -> (i32, i32) {
    %c0_i32 = arith.constant 0 : i32
    %c0_i32_0 = arith.constant 0 : i32
    %c0_i32_1 = arith.constant 0 : i32
    return %c0_i32, %c0_i32_0 : i32, i32
  }
  func.func @transform_6(%arg0: i32) -> (i32, i32) {
    %c0_i32 = arith.constant 0 : i32
    %c0_i32_0 = arith.constant 0 : i32
    %c0_i32_1 = arith.constant 0 : i32
    return %c0_i32, %c0_i32_0 : i32, i32
  }
  func.func @transform_7(%arg0: i32) -> (i32, i32, i32) {
    %c0_i32 = arith.constant 0 : i32
    %c0_i32_0 = arith.constant 0 : i32
    %c0_i32_1 = arith.constant 0 : i32
    return %arg0, %c0_i32, %c0_i32_0 : i32, i32, i32
  }
}

</mosaic_0001>

<llo_original>
// kernel: tile.23
$region0: #{tile.23}
  #allocation0 [shape = 's32[1]{0}', space=sflag, size = 0x4, scoped, tag = 'scoped memory for tile.23']
  %s0 = inlined_call_operand.vmem [shape: f32[4], index: 0, kind: input, shape index: {}]
  %s1 = inlined_call_operand.vmem [shape: f32[32,4], index: 1, kind: output, shape index: {}]
  // Predicated region
  $region2: #{tile.23} parent=0 // pred_check
    _
  $region3: #{tile.23} parent=0 // pred_check_branch
    %3 = sbr.rel (0) target = $region5
  $region4: #{tile.23} parent=0 // pred_region
    _
  $region5: #{tile.23} parent=0 // pred_fallthru
    _
  %v4 = vld [vmem:[%s0] ss:$0 sm:$0xff]
  %5 = vst [vmem:[%s1] sm:$0xff] %v4
  %s6 = scalar_lea.vmem %s1, 8
  %7 = vst [vmem:[%s6] sm:$0xff] %v4
  %s8 = scalar_lea.vmem %s1, 16
  %9 = vst [vmem:[%s8] sm:$0xff] %v4
  %s10 = scalar_lea.vmem %s1, 24
  %11 = vst [vmem:[%s10] sm:$0xff] %v4

// kernel: tile.24
$region0: #{tile.24}
  %s0 = inlined_call_operand.vmem [shape: f32[32,4], index: 0, kind: input, shape index: {}]
  %s1 = inlined_call_operand.vmem [shape: f32[1,128], index: 1, kind: output, shape index: {}]
  $region1: #{tile.24} parent=0
    #allocation0 [shape = 'u8[4096]{0}', space=vmem, size = 0x1000, scoped, tag = 'scoped mem for output reshape']
    %v2 = vld [vmem:[%s0] sm:$0x1]
    %vm3 = vcmask 31744
    %4 = vst.msk [vmem:[#allocation0] sm:$0x1] %vm3, %v2
    %s5 = scalar_lea.vmem %s0, 31
    %v6 = vld [vmem:[%s5] sm:$0x1]
    %7 = vrot.lane.b32.xlu0 %v6, 124
    %v8 = vpop.permute.xlu0 %7
    %vm9 = vcmask 1048544
    %10 = vst.msk [vmem:[#allocation0] sm:$0x1] %vm9, %v8
    %s11 = scalar_lea.vmem %s0, 30
    %v12 = vld [vmem:[%s11] sm:$0x1]
    %13 = vrot.lane.b32.xlu0 %v12, 120
    %v14 = vpop.permute.xlu0 %13
    %vm15 = vcmask 1015744
    %16 = vst.msk [vmem:[#allocation0] sm:$0x1] %vm15, %v14
    %s17 = scalar_lea.vmem %s0, 29
    %v18 = vld [vmem:[%s17] sm:$0x1]
    %19 = vrot.lane.b32.xlu0 %v18, 116
    %v20 = vpop.permute.xlu0 %19
    %vm21 = vcmask 982944
    %22 = vst.msk [vmem:[#allocation0] sm:$0x1] %vm21, %v20
    %s23 = scalar_lea.vmem %s0, 28
    %v24 = vld [vmem:[%s23] sm:$0x1]
    %25 = vrot.lane.b32.xlu0 %v24, 112
    %v26 = vpop.permute.xlu0 %25
    %vm27 = vcmask 950144
    %28 = vst.msk [vmem:[#allocation0] sm:$0x1] %vm27, %v26
    %s29 = scalar_lea.vmem %s0, 27
    %v30 = vld [vmem:[%s29] sm:$0x1]
    %31 = vrot.lane.b32.xlu0 %v30, 108
    %v32 = vpop.permute.xlu0 %31
    %vm33 = vcmask 917344
    %34 = vst.msk [vmem:[#allocation0] sm:$0x1] %vm33, %v32
    %s35 = scalar_lea.vmem %s0, 26
    %v36 = vld [vmem:[%s35] sm:$0x1]
    %37 = vrot.lane.b32.xlu0 %v36, 104
    %v38 = vpop.permute.xlu0 %37
    %vm39 = vcmask 884544
    %40 = vst.msk [vmem:[#allocation0] sm:$0x1] %vm39, %v38
    %s41 = scalar_lea.vmem %s0, 25
    %v42 = vld [vmem:[%s41] sm:$0x1]
    %43 = vrot.lane.b32.xlu0 %v42, 100
    %v44 = vpop.permute.xlu0 %43
    %vm45 = vcmask 851744
    %46 = vst.msk [vmem:[#allocation0] sm:$0x1] %vm45, %v44
    %s47 = scalar_lea.vmem %s0, 24
    %v48 = vld [vmem:[%s47] sm:$0x1]
    %49 = vrot.lane.b32.xlu0 %v48, 96
    %v50 = vpop.permute.xlu0 %49
    %vm51 = vcmask 818944
    %52 = vst.msk [vmem:[#allocation0] sm:$0x1] %vm51, %v50
    %s53 = scalar_lea.vmem %s0, 23
    %v54 = vld [vmem:[%s53] sm:$0x1]
    %55 = vrot.lane.b32.xlu0 %v54, 92
    %v56 = vpop.permute.xlu0 %55
    %vm57 = vcmask 786144
    %58 = vst.msk [vmem:[#allocation0] sm:$0x1] %vm57, %v56
    %s59 = scalar_lea.vmem %s0, 22
    %v60 = vld [vmem:[%s59] sm:$0x1]
    %61 = vrot.lane.b32.xlu0 %v60, 88
    %v62 = vpop.permute.xlu0 %61
    %vm63 = vcmask 753344
    %64 = vst.msk [vmem:[#allocation0] sm:$0x1] %vm63, %v62
    %s65 = scalar_lea.vmem %s0, 21
    %v66 = vld [vmem:[%s65] sm:$0x1]
    %67 = vrot.lane.b32.xlu0 %v66, 84
    %v68 = vpop.permute.xlu0 %67
    %vm69 = vcmask 720544
    %70 = vst.msk [vmem:[#allocation0] sm:$0x1] %vm69, %v68
    %s71 = scalar_lea.vmem %s0, 20
    %v72 = vld [vmem:[%s71] sm:$0x1]
    %73 = vrot.lane.b32.xlu0 %v72, 80
    %v74 = vpop.permute.xlu0 %73
    %vm75 = vcmask 687744
    %76 = vst.msk [vmem:[#allocation0] sm:$0x1] %vm75, %v74
    %s77 = scalar_lea.vmem %s0, 19
    %v78 = vld [vmem:[%s77] sm:$0x1]
    %79 = vrot.lane.b32.xlu0 %v78, 76
    %v80 = vpop.permute.xlu0 %79
    %vm81 = vcmask 654944
    %82 = vst.msk [vmem:[#allocation0] sm:$0x1] %vm81, %v80
    %s83 = scalar_lea.vmem %s0, 18
    %v84 = vld [vmem:[%s83] sm:$0x1]
    %85 = vrot.lane.b32.xlu0 %v84, 72
    %v86 = vpop.permute.xlu0 %85
    %vm87 = vcmask 622144
    %88 = vst.msk [vmem:[#allocation0] sm:$0x1] %vm87, %v86
    %s89 = scalar_lea.vmem %s0, 17
    %v90 = vld [vmem:[%s89] sm:$0x1]
    %91 = vrot.lane.b32.xlu0 %v90, 68
    %v92 = vpop.permute.xlu0 %91
    %vm93 = vcmask 589344
    %94 = vst.msk [vmem:[#allocation0] sm:$0x1] %vm93, %v92
    %s95 = scalar_lea.vmem %s0, 16
    %v96 = vld [vmem:[%s95] sm:$0x1]
    %97 = vrot.lane.b32.xlu0 %v96, 64
    %v98 = vpop.permute.xlu0 %97
    %vm99 = vcmask 556544
    %100 = vst.msk [vmem:[#allocation0] sm:$0x1] %vm99, %v98
    %s101 = scalar_lea.vmem %s0, 15
    %v102 = vld [vmem:[%s101] sm:$0x1]
    %103 = vrot.lane.b32.xlu0 %v102, 60
    %v104 = vpop.permute.xlu0 %103
    %vm105 = vcmask 523744
    %106 = vst.msk [vmem:[#allocation0] sm:$0x1] %vm105, %v104
    %s107 = scalar_lea.vmem %s0, 14
    %v108 = vld [vmem:[%s107] sm:$0x1]
    %109 = vrot.lane.b32.xlu0 %v108, 56
    %v110 = vpop.permute.xlu0 %109
    %vm111 = vcmask 490944
    %112 = vst.msk [vmem:[#allocation0] sm:$0x1] %vm111, %v110
    %s113 = scalar_lea.vmem %s0, 13
    %v114 = vld [vmem:[%s113] sm:$0x1]
    %115 = vrot.lane.b32.xlu0 %v114, 52
    %v116 = vpop.permute.xlu0 %115
    %vm117 = vcmask 458144
    %118 = vst.msk [vmem:[#allocation0] sm:$0x1] %vm117, %v116
    %s119 = scalar_lea.vmem %s0, 12
    %v120 = vld [vmem:[%s119] sm:$0x1]
    %121 = vrot.lane.b32.xlu0 %v120, 48
    %v122 = vpop.permute.xlu0 %121
    %vm123 = vcmask 425344
    %124 = vst.msk [vmem:[#allocation0] sm:$0x1] %vm123, %v122
    %s125 = scalar_lea.vmem %s0, 11
    %v126 = vld [vmem:[%s125] sm:$0x1]
    %127 = vrot.lane.b32.xlu0 %v126, 44
    %v128 = vpop.permute.xlu0 %127
    %vm129 = vcmask 392544
    %130 = vst.msk [vmem:[#allocation0] sm:$0x1] %vm129, %v128
    %s131 = scalar_lea.vmem %s0, 10
    %v132 = vld [vmem:[%s131] sm:$0x1]
    %133 = vrot.lane.b32.xlu0 %v132, 40
    %v134 = vpop.permute.xlu0 %133
    %vm135 = vcmask 359744
    %136 = vst.msk [vmem:[#allocation0] sm:$0x1] %vm135, %v134
    %s137 = scalar_lea.vmem %s0, 9
    %v138 = vld [vmem:[%s137] sm:$0x1]
    %139 = vrot.lane.b32.xlu0 %v138, 36
    %v140 = vpop.permute.xlu0 %139
    %vm141 = vcmask 326944
    %142 = vst.msk [vmem:[#allocation0] sm:$0x1] %vm141, %v140
    %s143 = scalar_lea.vmem %s0, 8
    %v144 = vld [vmem:[%s143] sm:$0x1]
    %145 = vrot.lane.b32.xlu0 %v144, 32
    %v146 = vpop.permute.xlu0 %145
    %vm147 = vcmask 294144
    %148 = vst.msk [vmem:[#allocation0] sm:$0x1] %vm147, %v146
    %s149 = scalar_lea.vmem %s0, 7
    %v150 = vld [vmem:[%s149] sm:$0x1]
    %151 = vrot.lane.b32.xlu0 %v150, 28
    %v152 = vpop.permute.xlu0 %151
    %vm153 = vcmask 261344
    %154 = vst.msk [vmem:[#allocation0] sm:$0x1] %vm153, %v152
    %s155 = scalar_lea.vmem %s0, 6
    %v156 = vld [vmem:[%s155] sm:$0x1]
    %157 = vrot.lane.b32.xlu0 %v156, 24
    %v158 = vpop.permute.xlu0 %157
    %vm159 = vcmask 228544
    %160 = vst.msk [vmem:[#allocation0] sm:$0x1] %vm159, %v158
    %s161 = scalar_lea.vmem %s0, 5
    %v162 = vld [vmem:[%s161] sm:$0x1]
    %163 = vrot.lane.b32.xlu0 %v162, 20
    %v164 = vpop.permute.xlu0 %163
    %vm165 = vcmask 195744
    %166 = vst.msk [vmem:[#allocation0] sm:$0x1] %vm165, %v164
    %s167 = scalar_lea.vmem %s0, 4
    %v168 = vld [vmem:[%s167] sm:$0x1]
    %169 = vrot.lane.b32.xlu0 %v168, 16
    %v170 = vpop.permute.xlu0 %169
    %vm171 = vcmask 162944
    %172 = vst.msk [vmem:[#allocation0] sm:$0x1] %vm171, %v170
    %s173 = scalar_lea.vmem %s0, 3
    %v174 = vld [vmem:[%s173] sm:$0x1]
    %175 = vrot.lane.b32.xlu0 %v174, 12
    %v176 = vpop.permute.xlu0 %175
    %vm177 = vcmask 130144
    %178 = vst.msk [vmem:[#allocation0] sm:$0x1] %vm177, %v176
    %s179 = scalar_lea.vmem %s0, 2
    %v180 = vld [vmem:[%s179] sm:$0x1]
    %181 = vrot.lane.b32.xlu0 %v180, 8
    %v182 = vpop.permute.xlu0 %181
    %vm183 = vcmask 97344
    %184 = vst.msk [vmem:[#allocation0] sm:$0x1] %vm183, %v182
    %s185 = scalar_lea.vmem %s0, 1
    %v186 = vld [vmem:[%s185] sm:$0x1]
    %187 = vrot.lane.b32.xlu0 %v186, 4
    %v188 = vpop.permute.xlu0 %187
    %vm189 = vcmask 64544
    %190 = vst.msk [vmem:[#allocation0] sm:$0x1] %vm189, %v188
    %s192 = sshll.u32 1, 1
    %s193 = ssub.s32 %s192, 1
    %v195 = vld [vmem:[#allocation0] sm:%s193]
    %s196 = sshll.u32 1, 1
    %s197 = ssub.s32 %s196, 1
    %198 = vst [vmem:[%s1] sm:%s197] %v195

// kernel: eblock_forward.1
$region0: #{eblock_forward.1}
  #allocation0 [shape = 'u32[]', space=smem, size = 0x4, offset = 0x4, fixed_abs, tag = 'smem constant byte address 0x4 - core index']
  #allocation1 [shape = 'u32[144,128]{1,0:T(1,128)}', space=vmem, size = 0x12000, scoped, tag = 'internal scratch']
  #allocation2 [shape = 'f32[18,128]{1,0:T(8,128)}', space=vmem, size = 0x3000, scoped, tag = 'scratch operand']
  %s0 = inlined_call_operand.vmem [shape: f32[1,16,128], index: 0, kind: input, shape index: {}]
  %s1 = inlined_call_operand.vmem [shape: f32[128,128], index: 1, kind: input, shape index: {}]
  %s2 = inlined_call_operand.vmem [shape: f32[1,128], index: 2, kind: input, shape index: {}]
  %s3 = inlined_call_operand.vmem [shape: f32[3,128,128], index: 3, kind: input, shape index: {}]
  %s4 = inlined_call_operand.vmem [shape: f32[1,128], index: 4, kind: input, shape index: {}]
  %s5 = inlined_call_operand.vmem [shape: f32[1,128], index: 5, kind: input, shape index: {}]
  %s6 = inlined_call_operand.vmem [shape: f32[1,128], index: 6, kind: input, shape index: {}]
  %s7 = inlined_call_operand.vmem [shape: f32[1,16,128], index: 7, kind: output, shape index: {}]
  %s8 = sld [smem:[#allocation0]]
  $region38: #{eblock_forward.1} parent=0
    _
  %s10 = ssub.s32 1, %s8
  %s11 = scalar_select 0, %s10, %s8
  // Predicated region
  $region2: #{eblock_forward.1} parent=0 // pred_check
    _
  $region3: #{eblock_forward.1} parent=0 // pred_check_branch
    %13 = sbr.rel (0) target = $region5
  $region4: #{eblock_forward.1} parent=0 // pred_region
    _
  $region5: #{eblock_forward.1} parent=0 // pred_fallthru
    _
  // Predicated region
  $region6: #{eblock_forward.1} parent=0 // pred_check
    _
  $region7: #{eblock_forward.1} parent=0 // pred_check_branch
    %15 = sbr.rel (0) target = $region9
  $region8: #{eblock_forward.1} parent=0 // pred_region
    _
  $region9: #{eblock_forward.1} parent=0 // pred_fallthru
    _
  // Predicated region
  $region10: #{eblock_forward.1} parent=0 // pred_check
    _
  $region11: #{eblock_forward.1} parent=0 // pred_check_branch
    %17 = sbr.rel (0) target = $region13
  $region12: #{eblock_forward.1} parent=0 // pred_region
    _
  $region13: #{eblock_forward.1} parent=0 // pred_fallthru
    _
  // Predicated region
  $region14: #{eblock_forward.1} parent=0 // pred_check
    _
  $region15: #{eblock_forward.1} parent=0 // pred_check_branch
    %19 = sbr.rel (0) target = $region17
  $region16: #{eblock_forward.1} parent=0 // pred_region
    _
  $region17: #{eblock_forward.1} parent=0 // pred_fallthru
    _
  // Predicated region
  $region18: #{eblock_forward.1} parent=0 // pred_check
    _
  $region19: #{eblock_forward.1} parent=0 // pred_check_branch
    %21 = sbr.rel (0) target = $region21
  $region20: #{eblock_forward.1} parent=0 // pred_region
    _
  $region21: #{eblock_forward.1} parent=0 // pred_fallthru
    _
  // Predicated region
  $region22: #{eblock_forward.1} parent=0 // pred_check
    _
  $region23: #{eblock_forward.1} parent=0 // pred_check_branch
    %23 = sbr.rel (0) target = $region25
  $region24: #{eblock_forward.1} parent=0 // pred_region
    _
  $region25: #{eblock_forward.1} parent=0 // pred_fallthru
    _
  // Predicated region
  $region26: #{eblock_forward.1} parent=0 // pred_check
    _
  $region27: #{eblock_forward.1} parent=0 // pred_check_branch
    %25 = sbr.rel (0) target = $region29
  $region28: #{eblock_forward.1} parent=0 // pred_region
    _
  $region29: #{eblock_forward.1} parent=0 // pred_fallthru
    _
  %v26 = vld [vmem:[%s0] sm:$0xff]
  %v27 = vld [vmem:[%s0 + $0x8] sm:$0xff]
  %v28 = vld [vmem:[%s1] sm:$0xff]
  %v29 = vld [vmem:[%s1 + $0x8] sm:$0xff]
  %v30 = vld [vmem:[%s1 + $0x10] sm:$0xff]
  %v31 = vld [vmem:[%s1 + $0x18] sm:$0xff]
  %v32 = vld [vmem:[%s1 + $0x20] sm:$0xff]
  %v33 = vld [vmem:[%s1 + $0x28] sm:$0xff]
  %v34 = vld [vmem:[%s1 + $0x30] sm:$0xff]
  %v35 = vld [vmem:[%s1 + $0x38] sm:$0xff]
  %v36 = vld [vmem:[%s1 + $0x40] sm:$0xff]
  %v37 = vld [vmem:[%s1 + $0x48] sm:$0xff]
  %v38 = vld [vmem:[%s1 + $0x50] sm:$0xff]
  %v39 = vld [vmem:[%s1 + $0x58] sm:$0xff]
  %v40 = vld [vmem:[%s1 + $0x60] sm:$0xff]
  %v41 = vld [vmem:[%s1 + $0x68] sm:$0xff]
  %v42 = vld [vmem:[%s1 + $0x70] sm:$0xff]
  %v43 = vld [vmem:[%s1 + $0x78] sm:$0xff]
  %v44 = vld [vmem:[%s2] sm:$0x1]
  %v46 = vlaneseq
  %v47 = vshrl.u32 %v46, 7
  %v48 = vsub.s32 0, %v47
  %v49 = vrot.slane %v44, %v48
  %51 = vmatprep.subr.mxu0 0.0
  %52 = vmatpush1.msra.mxu0 %v43
  %53 = vmatprep.subr.mxu0 0.0
  %54 = vmatpush1.msra.mxu0 %v42
  %55 = vmatprep.subr.mxu0 0.0
  %56 = vmatpush1.msra.mxu0 %v41
  %57 = vmatprep.subr.mxu0 0.0
  %58 = vmatpush1.msra.mxu0 %v40
  %59 = vmatprep.subr.mxu0 0.0
  %60 = vmatpush1.msra.mxu0 %v39
  %61 = vmatprep.subr.mxu0 0.0
  %62 = vmatpush1.msra.mxu0 %v38
  %63 = vmatprep.subr.mxu0 0.0
  %64 = vmatpush1.msra.mxu0 %v37
  %65 = vmatprep.subr.mxu0 0.0
  %66 = vmatpush1.msra.mxu0 %v36
  %67 = vmatprep.subr.mxu0 0.0
  %68 = vmatpush1.msra.mxu0 %v35
  %69 = vmatprep.subr.mxu0 0.0
  %70 = vmatpush1.msra.mxu0 %v34
  %71 = vmatprep.subr.mxu0 0.0
  %72 = vmatpush1.msra.mxu0 %v33
  %73 = vmatprep.subr.mxu0 0.0
  %74 = vmatpush1.msra.mxu0 %v32
  %75 = vmatprep.subr.mxu0 0.0
  %76 = vmatpush1.msra.mxu0 %v31
  %77 = vmatprep.subr.mxu0 0.0
  %78 = vmatpush1.msra.mxu0 %v30
  %79 = vmatprep.subr.mxu0 0.0
  %80 = vmatpush1.msra.mxu0 %v29
  %81 = vmatprep.subr.mxu0 0.0
  %82 = vmatpush1.msra.mxu0 %v28
  %83 = vmatprep.subr.mxu0 0.0
  %84 = vmatpush2.msra.mxu0 0.0
  %85 = vmatprep.subr.mxu0 0.0
  %86 = vmatpush2.msra.mxu0 0.0
  %87 = vmatprep.subr.mxu0 0.0
  %88 = vmatpush2.msra.mxu0 0.0
  %89 = vmatprep.subr.mxu0 0.0
  %90 = vmatpush2.msra.mxu0 0.0
  %91 = vmatprep.subr.mxu0 0.0
  %92 = vmatpush2.msra.mxu0 0.0
  %93 = vmatprep.subr.mxu0 0.0
  %94 = vmatpush2.msra.mxu0 0.0
  %95 = vmatprep.subr.mxu0 0.0
  %96 = vmatpush2.msra.mxu0 0.0
  %97 = vmatprep.subr.mxu0 0.0
  %98 = vmatpush2.msra.mxu0 0.0
  %99 = vmatprep.subr.mxu0 0.0
  %100 = vmatpush2.msra.mxu0 0.0
  %101 = vmatprep.subr.mxu0 0.0
  %102 = vmatpush2.msra.mxu0 0.0
  %103 = vmatprep.subr.mxu0 0.0
  %104 = vmatpush2.msra.mxu0 0.0
  %105 = vmatprep.subr.mxu0 0.0
  %106 = vmatpush2.msra.mxu0 0.0
  %107 = vmatprep.subr.mxu0 0.0
  %108 = vmatpush2.msra.mxu0 0.0
  %109 = vmatprep.subr.mxu0 0.0
  %110 = vmatpush2.msra.mxu0 0.0
  %111 = vmatprep.subr.mxu0 0.0
  %112 = vmatpush2.msra.mxu0 0.0
  %113 = vmatprep.subr.mxu0 0.0
  %114 = vmatpush2.msra.mxu0 0.0
  %115 = vmatprep.mubr.f32.mxu0 0.0
  %116 = vmatmul.mubr.f32.gmra.mxu0 %v26
  %v117 = vpop.f32.mrf.mxu0
  %v118 = vadd.f32 %v49, %v117
  %v119 = vpop.f32.mrf.mxu0
  %120 = vmatprep.mubr.f32.mxu0 0.0
  %121 = vmatmul.mubr.f32.gmra.mxu0 %v27
  %v122 = vpop.f32.mrf.mxu0
  %v123 = vadd.f32 %v49, %v122
  %v124 = vpop.f32.mrf.mxu0
  %125 = vdwg.mxu0
  %vm126 = vcmp.gt.f32.partialorder %v118, 0.0
  %vm127 = vcmp.gt.f32.partialorder %v123, 0.0
  %v128 = vmin.f32 %v118, 0.0
  %v129 = vmin.f32 %v123, 0.0
  %v130 = vmul.f32 %v128, 1.442695
  %v131 = vpow.pop %v130
  %v132 = vmul.f32 %v129, 1.442695
  %v133 = vpow.pop %v132
  %v134 = vsub.f32 %v131, 1.0
  %v135 = vsub.f32 %v133, 1.0
  %v136 = vsel %vm126, %v118, %v134
  %v137 = vsel %vm127, %v123, %v135
  %138 = vst [vmem:[#allocation2] sm:$0x1] 0.0
  %139 = vst [vmem:[#allocation2 + $0x11] sm:$0x1] 0.0
  %140 = vst [vmem:[#allocation2 + $0x1] sm:$0xff] %v136
  %141 = vst [vmem:[#allocation2 + $0x9] sm:$0xff] %v137
  %v142 = vld [vmem:[#allocation2] sm:$0xff]
  %v143 = vld [vmem:[#allocation2 + $0x8] sm:$0xff]
  %v144 = vld [vmem:[%s3] sm:$0xff]
  %v145 = vld [vmem:[%s3 + $0x8] sm:$0xff]
  %v146 = vld [vmem:[%s3 + $0x10] sm:$0xff]
  %v147 = vld [vmem:[%s3 + $0x18] sm:$0xff]
  %v148 = vld [vmem:[%s3 + $0x20] sm:$0xff]
  %v149 = vld [vmem:[%s3 + $0x28] sm:$0xff]
  %v150 = vld [vmem:[%s3 + $0x30] sm:$0xff]
  %v151 = vld [vmem:[%s3 + $0x38] sm:$0xff]
  %v152 = vld [vmem:[%s3 + $0x40] sm:$0xff]
  %v153 = vld [vmem:[%s3 + $0x48] sm:$0xff]
  %v154 = vld [vmem:[%s3 + $0x50] sm:$0xff]
  %v155 = vld [vmem:[%s3 + $0x58] sm:$0xff]
  %v156 = vld [vmem:[%s3 + $0x60] sm:$0xff]
  %v157 = vld [vmem:[%s3 + $0x68] sm:$0xff]
  %v158 = vld [vmem:[%s3 + $0x70] sm:$0xff]
  %v159 = vld [vmem:[%s3 + $0x78] sm:$0xff]
  %v160 = vld [vmem:[#allocation2 + $0x1] sm:$0xff]
  %v161 = vld [vmem:[#allocation2 + $0x9] sm:$0xff]
  %s162 = scalar_lea.vmem %s3, 128
  %v163 = vld [vmem:[%s162] sm:$0xff]
  %v164 = vld [vmem:[%s162 + $0x8] sm:$0xff]
  %v165 = vld [vmem:[%s162 + $0x10] sm:$0xff]
  %v166 = vld [vmem:[%s162 + $0x18] sm:$0xff]
  %v167 = vld [vmem:[%s162 + $0x20] sm:$0xff]
  %v168 = vld [vmem:[%s162 + $0x28] sm:$0xff]
  %v169 = vld [vmem:[%s162 + $0x30] sm:$0xff]
  %v170 = vld [vmem:[%s162 + $0x38] sm:$0xff]
  %v171 = vld [vmem:[%s162 + $0x40] sm:$0xff]
  %v172 = vld [vmem:[%s162 + $0x48] sm:$0xff]
  %v173 = vld [vmem:[%s162 + $0x50] sm:$0xff]
  %v174 = vld [vmem:[%s162 + $0x58] sm:$0xff]
  %v175 = vld [vmem:[%s162 + $0x60] sm:$0xff]
  %v176 = vld [vmem:[%s162 + $0x68] sm:$0xff]
  %v177 = vld [vmem:[%s162 + $0x70] sm:$0xff]
  %v178 = vld [vmem:[%s162 + $0x78] sm:$0xff]
  %179 = vmatprep.subr.mxu0 0.0
  %180 = vmatpush1.msra.mxu0 %v178
  %181 = vmatprep.subr.mxu0 0.0
  %182 = vmatpush1.msra.mxu0 %v177
  %183 = vmatprep.subr.mxu0 0.0
  %184 = vmatpush1.msra.mxu0 %v176
  %185 = vmatprep.subr.mxu0 0.0
  %186 = vmatpush1.msra.mxu0 %v175
  %187 = vmatprep.subr.mxu0 0.0
  %188 = vmatpush1.msra.mxu0 %v174
  %189 = vmatprep.subr.mxu0 0.0
  %190 = vmatpush1.msra.mxu0 %v173
  %191 = vmatprep.subr.mxu0 0.0
  %192 = vmatpush1.msra.mxu0 %v172
  %193 = vmatprep.subr.mxu0 0.0
  %194 = vmatpush1.msra.mxu0 %v171
  %195 = vmatprep.subr.mxu0 0.0
  %196 = vmatpush1.msra.mxu0 %v170
  %197 = vmatprep.subr.mxu0 0.0
  %198 = vmatpush1.msra.mxu0 %v169
  %199 = vmatprep.subr.mxu0 0.0
  %200 = vmatpush1.msra.mxu0 %v168
  %201 = vmatprep.subr.mxu0 0.0
  %202 = vmatpush1.msra.mxu0 %v167
  %203 = vmatprep.subr.mxu0 0.0
  %204 = vmatpush1.msra.mxu0 %v166
  %205 = vmatprep.subr.mxu0 0.0
  %206 = vmatpush1.msra.mxu0 %v165
  %207 = vmatprep.subr.mxu0 0.0
  %208 = vmatpush1.msra.mxu0 %v164
  %209 = vmatprep.subr.mxu0 0.0
  %210 = vmatpush1.msra.mxu0 %v163
  %211 = vmatprep.subr.mxu0 0.0
  %212 = vmatpush2.msra.mxu0 0.0
  %213 = vmatprep.subr.mxu0 0.0
  %214 = vmatpush2.msra.mxu0 0.0
  %215 = vmatprep.subr.mxu0 0.0
  %216 = vmatpush2.msra.mxu0 0.0
  %217 = vmatprep.subr.mxu0 0.0
  %218 = vmatpush2.msra.mxu0 0.0
  %219 = vmatprep.subr.mxu0 0.0
  %220 = vmatpush2.msra.mxu0 0.0
  %221 = vmatprep.subr.mxu0 0.0
  %222 = vmatpush2.msra.mxu0 0.0
  %223 = vmatprep.subr.mxu0 0.0
  %224 = vmatpush2.msra.mxu0 0.0
  %225 = vmatprep.subr.mxu0 0.0
  %226 = vmatpush2.msra.mxu0 0.0
  %227 = vmatprep.subr.mxu0 0.0
  %228 = vmatpush2.msra.mxu0 0.0
  %229 = vmatprep.subr.mxu0 0.0
  %230 = vmatpush2.msra.mxu0 0.0
  %231 = vmatprep.subr.mxu0 0.0
  %232 = vmatpush2.msra.mxu0 0.0
  %233 = vmatprep.subr.mxu0 0.0
  %234 = vmatpush2.msra.mxu0 0.0
  %235 = vmatprep.subr.mxu0 0.0
  %236 = vmatpush2.msra.mxu0 0.0
  %237 = vmatprep.subr.mxu0 0.0
  %238 = vmatpush2.msra.mxu0 0.0
  %239 = vmatprep.subr.mxu0 0.0
  %240 = vmatpush2.msra.mxu0 0.0
  %241 = vmatprep.subr.mxu0 0.0
  %242 = vmatpush2.msra.mxu0 0.0
  %243 = vmatprep.mubr.f32.mxu0 0.0
  %244 = vmatmul.mubr.f32.gmra.mxu0 %v160
  %v245 = vpop.f32.mrf.mxu0
  %v246 = vadd.f32 0.0, %v245
  %v247 = vpop.f32.mrf.mxu0
  %248 = vmatprep.mubr.f32.mxu0 0.0
  %249 = vmatmul.mubr.f32.gmra.mxu0 %v161
  %v250 = vpop.f32.mrf.mxu0
  %v251 = vadd.f32 0.0, %v250
  %v252 = vpop.f32.mrf.mxu0
  %253 = vdwg.mxu0
  %254 = vmatprep.subr.mxu0 0.0
  %255 = vmatpush1.msra.mxu0 %v159
  %256 = vmatprep.subr.mxu0 0.0
  %257 = vmatpush1.msra.mxu0 %v158
  %258 = vmatprep.subr.mxu0 0.0
  %259 = vmatpush1.msra.mxu0 %v157
  %260 = vmatprep.subr.mxu0 0.0
  %261 = vmatpush1.msra.mxu0 %v156
  %262 = vmatprep.subr.mxu0 0.0
  %263 = vmatpush1.msra.mxu0 %v155
  %264 = vmatprep.subr.mxu0 0.0
  %265 = vmatpush1.msra.mxu0 %v154
  %266 = vmatprep.subr.mxu0 0.0
  %267 = vmatpush1.msra.mxu0 %v153
  %268 = vmatprep.subr.mxu0 0.0
  %269 = vmatpush1.msra.mxu0 %v152
  %270 = vmatprep.subr.mxu0 0.0
  %271 = vmatpush1.msra.mxu0 %v151
  %272 = vmatprep.subr.mxu0 0.0
  %273 = vmatpush1.msra.mxu0 %v150
  %274 = vmatprep.subr.mxu0 0.0
  %275 = vmatpush1.msra.mxu0 %v149
  %276 = vmatprep.subr.mxu0 0.0
  %277 = vmatpush1.msra.mxu0 %v148
  %278 = vmatprep.subr.mxu0 0.0
  %279 = vmatpush1.msra.mxu0 %v147
  %280 = vmatprep.subr.mxu0 0.0
  %281 = vmatpush1.msra.mxu0 %v146
  %282 = vmatprep.subr.mxu0 0.0
  %283 = vmatpush1.msra.mxu0 %v145
  %284 = vmatprep.subr.mxu0 0.0
  %285 = vmatpush1.msra.mxu0 %v144
  %286 = vmatprep.subr.mxu0 0.0
  %287 = vmatpush2.msra.mxu0 0.0
  %288 = vmatprep.subr.mxu0 0.0
  %289 = vmatpush2.msra.mxu0 0.0
  %290 = vmatprep.subr.mxu0 0.0
  %291 = vmatpush2.msra.mxu0 0.0
  %292 = vmatprep.subr.mxu0 0.0
  %293 = vmatpush2.msra.mxu0 0.0
  %294 = vmatprep.subr.mxu0 0.0
  %295 = vmatpush2.msra.mxu0 0.0
  %296 = vmatprep.subr.mxu0 0.0
  %297 = vmatpush2.msra.mxu0 0.0
  %298 = vmatprep.subr.mxu0 0.0
  %299 = vmatpush2.msra.mxu0 0.0
  %300 = vmatprep.subr.mxu0 0.0
  %301 = vmatpush2.msra.mxu0 0.0
  %302 = vmatprep.subr.mxu0 0.0
  %303 = vmatpush2.msra.mxu0 0.0
  %304 = vmatprep.subr.mxu0 0.0
  %305 = vmatpush2.msra.mxu0 0.0
  %306 = vmatprep.subr.mxu0 0.0
  %307 = vmatpush2.msra.mxu0 0.0
  %308 = vmatprep.subr.mxu0 0.0
  %309 = vmatpush2.msra.mxu0 0.0
  %310 = vmatprep.subr.mxu0 0.0
  %311 = vmatpush2.msra.mxu0 0.0
  %312 = vmatprep.subr.mxu0 0.0
  %313 = vmatpush2.msra.mxu0 0.0
  %314 = vmatprep.subr.mxu0 0.0
  %315 = vmatpush2.msra.mxu0 0.0
  %316 = vmatprep.subr.mxu0 0.0
  %317 = vmatpush2.msra.mxu0 0.0
  %318 = vmatprep.mubr.f32.mxu0 0.0
  %319 = vmatmul.mubr.f32.gmra.mxu0 %v142
  %v320 = vpop.f32.mrf.mxu0
  %v321 = vadd.f32 %v246, %v320
  %v322 = vpop.f32.mrf.mxu0
  %323 = vmatprep.mubr.f32.mxu0 0.0
  %324 = vmatmul.mubr.f32.gmra.mxu0 %v143
  %v325 = vpop.f32.mrf.mxu0
  %v326 = vadd.f32 %v251, %v325
  %v327 = vpop.f32.mrf.mxu0
  %328 = vdwg.mxu0
  %v329 = vld [vmem:[#allocation2 + $0x2] sm:$0xff]
  %v330 = vld [vmem:[#allocation2 + $0xa] sm:$0xff]
  %s331 = scalar_lea.vmem %s3, 256
  %v332 = vld [vmem:[%s331] sm:$0xff]
  %v333 = vld [vmem:[%s331 + $0x8] sm:$0xff]
  %v334 = vld [vmem:[%s331 + $0x10] sm:$0xff]
  %v335 = vld [vmem:[%s331 + $0x18] sm:$0xff]
  %v336 = vld [vmem:[%s331 + $0x20] sm:$0xff]
  %v337 = vld [vmem:[%s331 + $0x28] sm:$0xff]
  %v338 = vld [vmem:[%s331 + $0x30] sm:$0xff]
  %v339 = vld [vmem:[%s331 + $0x38] sm:$0xff]
  %v340 = vld [vmem:[%s331 + $0x40] sm:$0xff]
  %v341 = vld [vmem:[%s331 + $0x48] sm:$0xff]
  %v342 = vld [vmem:[%s331 + $0x50] sm:$0xff]
  %v343 = vld [vmem:[%s331 + $0x58] sm:$0xff]
  %v344 = vld [vmem:[%s331 + $0x60] sm:$0xff]
  %v345 = vld [vmem:[%s331 + $0x68] sm:$0xff]
  %v346 = vld [vmem:[%s331 + $0x70] sm:$0xff]
  %v347 = vld [vmem:[%s331 + $0x78] sm:$0xff]
  %348 = vmatprep.subr.mxu0 0.0
  %349 = vmatpush1.msra.mxu0 %v347
  %350 = vmatprep.subr.mxu0 0.0
  %351 = vmatpush1.msra.mxu0 %v346
  %352 = vmatprep.subr.mxu0 0.0
  %353 = vmatpush1.msra.mxu0 %v345
  %354 = vmatprep.subr.mxu0 0.0
  %355 = vmatpush1.msra.mxu0 %v344
  %356 = vmatprep.subr.mxu0 0.0
  %357 = vmatpush1.msra.mxu0 %v343
  %358 = vmatprep.subr.mxu0 0.0
  %359 = vmatpush1.msra.mxu0 %v342
  %360 = vmatprep.subr.mxu0 0.0
  %361 = vmatpush1.msra.mxu0 %v341
  %362 = vmatprep.subr.mxu0 0.0
  %363 = vmatpush1.msra.mxu0 %v340
  %364 = vmatprep.subr.mxu0 0.0
  %365 = vmatpush1.msra.mxu0 %v339
  %366 = vmatprep.subr.mxu0 0.0
  %367 = vmatpush1.msra.mxu0 %v338
  %368 = vmatprep.subr.mxu0 0.0
  %369 = vmatpush1.msra.mxu0 %v337
  %370 = vmatprep.subr.mxu0 0.0
  %371 = vmatpush1.msra.mxu0 %v336
  %372 = vmatprep.subr.mxu0 0.0
  %373 = vmatpush1.msra.mxu0 %v335
  %374 = vmatprep.subr.mxu0 0.0
  %375 = vmatpush1.msra.mxu0 %v334
  %376 = vmatprep.subr.mxu0 0.0
  %377 = vmatpush1.msra.mxu0 %v333
  %378 = vmatprep.subr.mxu0 0.0
  %379 = vmatpush1.msra.mxu0 %v332
  %380 = vmatprep.subr.mxu0 0.0
  %381 = vmatpush2.msra.mxu0 0.0
  %382 = vmatprep.subr.mxu0 0.0
  %383 = vmatpush2.msra.mxu0 0.0
  %384 = vmatprep.subr.mxu0 0.0
  %385 = vmatpush2.msra.mxu0 0.0
  %386 = vmatprep.subr.mxu0 0.0
  %387 = vmatpush2.msra.mxu0 0.0
  %388 = vmatprep.subr.mxu0 0.0
  %389 = vmatpush2.msra.mxu0 0.0
  %390 = vmatprep.subr.mxu0 0.0
  %391 = vmatpush2.msra.mxu0 0.0
  %392 = vmatprep.subr.mxu0 0.0
  %393 = vmatpush2.msra.mxu0 0.0
  %394 = vmatprep.subr.mxu0 0.0
  %395 = vmatpush2.msra.mxu0 0.0
  %396 = vmatprep.subr.mxu0 0.0
  %397 = vmatpush2.msra.mxu0 0.0
  %398 = vmatprep.subr.mxu0 0.0
  %399 = vmatpush2.msra.mxu0 0.0
  %400 = vmatprep.subr.mxu0 0.0
  %401 = vmatpush2.msra.mxu0 0.0
  %402 = vmatprep.subr.mxu0 0.0
  %403 = vmatpush2.msra.mxu0 0.0
  %404 = vmatprep.subr.mxu0 0.0
  %405 = vmatpush2.msra.mxu0 0.0
  %406 = vmatprep.subr.mxu0 0.0
  %407 = vmatpush2.msra.mxu0 0.0
  %408 = vmatprep.subr.mxu0 0.0
  %409 = vmatpush2.msra.mxu0 0.0
  %410 = vmatprep.subr.mxu0 0.0
  %411 = vmatpush2.msra.mxu0 0.0
  %412 = vmatprep.mubr.f32.mxu0 0.0
  %413 = vmatmul.mubr.f32.gmra.mxu0 %v329
  %v414 = vpop.f32.mrf.mxu0
  %v415 = vadd.f32 0.0, %v414
  %v416 = vpop.f32.mrf.mxu0
  %417 = vmatprep.mubr.f32.mxu0 0.0
  %418 = vmatmul.mubr.f32.gmra.mxu0 %v330
  %v419 = vpop.f32.mrf.mxu0
  %v420 = vadd.f32 0.0, %v419
  %v421 = vpop.f32.mrf.mxu0
  %422 = vdwg.mxu0
  %v423 = vadd.f32 %v321, %v415
  %v424 = vadd.f32 %v326, %v420
  %v425 = vld [vmem:[%s4] sm:$0x1]
  %v427 = vlaneseq
  %v428 = vshrl.u32 %v427, 7
  %v429 = vsub.s32 0, %v428
  %v430 = vrot.slane %v425, %v429
  %v432 = vadd.f32 %v423, %v430
  %v433 = vadd.f32 %v424, %v430
  %vm434 = vcmp.gt.f32.partialorder %v432, 0.0
  %vm435 = vcmp.gt.f32.partialorder %v433, 0.0
  %v436 = vmin.f32 %v432, 0.0
  %v437 = vmin.f32 %v433, 0.0
  %v438 = vmul.f32 %v436, 1.442695
  %v439 = vpow.pop %v438
  %v440 = vmul.f32 %v437, 1.442695
  %v441 = vpow.pop %v440
  %v442 = vsub.f32 %v439, 1.0
  %v443 = vsub.f32 %v441, 1.0
  %v444 = vsel %vm434, %v432, %v442
  %v445 = vsel %vm435, %v433, %v443
  %v446 = vadd.f32 %v444, %v26
  %v447 = vadd.f32 %v445, %v27
  %v448 = vlaneseq
  %v449 = vand.u32 %v448, 127
  %vm450 = vcmp.lt.s32.totalorder %v449, 64
  %v451 = vsel %vm450, 1, 0
  %v452 = vcvt.s32.f32 %v451
  %v453 = vmul.f32 %v446, %v446
  %v454 = vmul.f32 %v447, %v447
  %v455 = vadd.f32 %v446, %v447
  %456 = vadd.xlane.f32.xlu0 %v455
  %v457 = vpop.xlane.xlu0 %456
  %v458 = vrot.slane %v457, 4
  %v459 = vadd.f32 %v457, %v458
  %v460 = vrot.slane %v459, 2
  %v461 = vadd.f32 %v459, %v460
  %v462 = vrot.slane %v461, 1
  %v463 = vadd.f32 %v461, %v462
  %s464 = vtos %v463
  %v465 = vmul.f32 %v446, %v452
  %v466 = vmul.f32 %v447, %v452
  %v467 = vadd.f32 %v465, %v466
  %468 = vadd.xlane.f32.xlu0 %v467
  %v469 = vpop.xlane.xlu0 %468
  %v470 = vrot.slane %v469, 4
  %v471 = vadd.f32 %v469, %v470
  %v472 = vrot.slane %v471, 2
  %v473 = vadd.f32 %v471, %v472
  %v474 = vrot.slane %v473, 1
  %v475 = vadd.f32 %v473, %v474
  %s476 = vtos %v475
  %s477 = ssub.f32 %s464, %s476
  %v478 = vadd.f32 %v453, %v454
  %479 = vadd.xlane.f32.xlu0 %v478
  %v480 = vpop.xlane.xlu0 %479
  %v481 = vrot.slane %v480, 4
  %v482 = vadd.f32 %v480, %v481
  %v483 = vrot.slane %v482, 2
  %v484 = vadd.f32 %v482, %v483
  %v485 = vrot.slane %v484, 1
  %v486 = vadd.f32 %v484, %v485
  %s487 = vtos %v486
  %v488 = vmul.f32 %v453, %v452
  %v489 = vmul.f32 %v454, %v452
  %v490 = vadd.f32 %v488, %v489
  %491 = vadd.xlane.f32.xlu0 %v490
  %v492 = vpop.xlane.xlu0 %491
  %v493 = vrot.slane %v492, 4
  %v494 = vadd.f32 %v492, %v493
  %v495 = vrot.slane %v494, 2
  %v496 = vadd.f32 %v494, %v495
  %v497 = vrot.slane %v496, 1
  %v498 = vadd.f32 %v496, %v497
  %s499 = vtos %v498
  %s500 = ssub.f32 %s487, %s499
  %v501 = vrcp.pop 1024.0
  %s502 = vtos %v501
  %s503 = smul.f32 %s476, %s502
  %v504 = vrcp.pop 1024.0
  %s505 = vtos %v504
  %s506 = smul.f32 %s477, %s505
  %v507 = vrcp.pop 1024.0
  %s508 = vtos %v507
  %s509 = smul.f32 %s499, %s508
  %s510 = smul.f32 %s503, %s503
  %s511 = ssub.f32 %s509, %s510
  %v512 = vrcp.pop 1024.0
  %s513 = vtos %v512
  %s514 = smul.f32 %s500, %s513
  %s515 = smul.f32 %s506, %s506
  %s516 = ssub.f32 %s514, %s515
  %s517 = sadd.f32 %s511, 1e-05
  %v518 = vstv %s517
  %v519 = vrsqrt.pop %v518
  %s520 = vtos %v519
  %s521 = sadd.f32 %s516, 1e-05
  %v522 = vstv %s521
  %v523 = vrsqrt.pop %v522
  %s524 = vtos %v523
  %v525 = vstv %s503
  %v526 = vstv %s506
  %v527 = vsel %vm450, %v525, %v526
  %v528 = vstv %s520
  %v529 = vstv %s524
  %v530 = vsel %vm450, %v528, %v529
  %v531 = vsub.f32 %v446, %v527
  %v532 = vsub.f32 %v447, %v527
  %v533 = vmul.f32 %v531, %v530
  %v534 = vmul.f32 %v532, %v530
  %v535 = vld [vmem:[%s5] sm:$0x1]
  %v537 = vlaneseq
  %v538 = vshrl.u32 %v537, 7
  %v539 = vsub.s32 0, %v538
  %v540 = vrot.slane %v535, %v539
  %v542 = vmul.f32 %v533, %v540
  %v543 = vmul.f32 %v534, %v540
  %v544 = vld [vmem:[%s6] sm:$0x1]
  %v546 = vlaneseq
  %v547 = vshrl.u32 %v546, 7
  %v548 = vsub.s32 0, %v547
  %v549 = vrot.slane %v544, %v548
  %v551 = vadd.f32 %v542, %v549
  %v552 = vadd.f32 %v543, %v549
  %vm553 = vcmp.gt.f32.partialorder %v551, 0.0
  %vm554 = vcmp.gt.f32.partialorder %v552, 0.0
  %v555 = vmin.f32 %v551, 0.0
  %v556 = vmin.f32 %v552, 0.0
  %v557 = vmul.f32 %v555, 1.442695
  %v558 = vpow.pop %v557
  %v559 = vmul.f32 %v556, 1.442695
  %v560 = vpow.pop %v559
  %v561 = vsub.f32 %v558, 1.0
  %v562 = vsub.f32 %v560, 1.0
  %v563 = vsel %vm553, %v551, %v561
  %v564 = vsel %vm554, %v552, %v562
  %565 = vst [vmem:[%s7] sm:$0xff] %v563
  %566 = vst [vmem:[%s7 + $0x8] sm:$0xff] %v564
  // Predicated region
  $region30: #{eblock_forward.1} parent=0 // pred_check
    _
  $region31: #{eblock_forward.1} parent=0 // pred_check_branch
    %568 = sbr.rel (0) target = $region33
  $region32: #{eblock_forward.1} parent=0 // pred_region
    _
  $region33: #{eblock_forward.1} parent=0 // pred_fallthru
    _
  // Predicated region
  $region34: #{eblock_forward.1} parent=0 // pred_check
    _
  $region35: #{eblock_forward.1} parent=0 // pred_check_branch
    %570 = sbr.rel (0) target = $region37
  $region36: #{eblock_forward.1} parent=0 // pred_region
    _
  $region37: #{eblock_forward.1} parent=0 // pred_fallthru
    _

</llo_original>
